<compile_context>
chip_gen: v7x
topology: tpu7x:2x2x1
jax: 0.10.0
libtpu: 0.0.40
codegen_flags: <defaults>
</compile_context>

<pallas_src>
import jax
import jax.numpy as jnp
from jax.experimental import pallas as pl
from jax.experimental.pallas import tpu as pltpu

_MIB = 1 << 20


# ----------------------------------------------------------------------------
# helpers
# ----------------------------------------------------------------------------
def _round_up(x, m):
    return ((x + m - 1) // m) * m


def _lane_tile_cap(default=2048):
    """Generation-aware cap for the H*W lane tile (bigger tiles on 128 MiB-VMEM chips)."""
    try:
        info = pltpu.get_tpu_info()
        vmem = getattr(info, "vmem_capacity_bytes", None)
        if vmem is not None and vmem >= 100 * _MIB:      # v5e / v6e: 128 MiB VMEM
            return 4096
    except Exception:
        pass
    return default                                       # v7x: 64 MiB physical / 32 MiB scoped


def _pick_lane_tile(total, cap):
    """Lane tile for the H*W axis.  Returns (tile, padded_total).

    Full extent when it fits under the cap; otherwise the largest 128-multiple divisor
    <= cap; otherwise pad up to a multiple of the cap (<1% extra lanes at production
    resolutions) so lane tiling is unconditional — no full-H*W output-block fallback."""
    cap = max(128, cap - cap % 128)
    if total <= cap:
        return total, total
    if total % 128 == 0:
        t = cap
        while t >= 128:
            if total % t == 0:
                return t, total
            t -= 128
    return cap, _round_up(total, cap)


def _vmem_limit(block_bytes):
    """vmem_limit_bytes from the (double-buffered) block budget, clamped to a range that
    is safe on every generation (>= default scoped limit, <= v7x physical VMEM)."""
    return int(max(32 * _MIB, min(2 * block_bytes + 4 * _MIB, 64 * _MIB)))


# ----------------------------------------------------------------------------
# Fused heads + mask-einsum kernel
#   grid = (T*B, n_hw); per frame tb:
#     hw == 0 : kern  = MLP(hs)  -> persistent VMEM scratch   (never hits HBM)
#               isref = hs @ Wr + br                          (hw-invariant output block)
#     every hw: masks[tb, :, hw-tile] = kern @ frame_features[tb, :, hw-tile]
# ----------------------------------------------------------------------------
def _make_heads_masks_kernel(valid_rows, compute_dtype):
    cd = compute_dtype

    def kernel(hs_ref, f_ref, w0_ref, b0_ref, w1_ref, b1_ref, wr_ref, br_ref,
               masks_ref, isref_ref, kern_sc):
        # --- once per frame (first hw tile): 2-layer MLP + is_referred head ------------
        @pl.when(pl.program_id(1) == 0)
        def _():
            hs = hs_ref[0].astype(cd)                                       # (LN_pad, d)
            h1 = jnp.dot(hs, w0_ref[...],
                         preferred_element_type=jnp.float32) + b0_ref[...]
            h1 = jnp.maximum(h1, 0.0)                                       # f32 epilogue
            kern_sc[...] = jnp.dot(h1.astype(cd), w1_ref[...],
                                   preferred_element_type=jnp.float32) + b1_ref[...]
            isref = jnp.dot(hs, wr_ref[...],
                            preferred_element_type=jnp.float32) + br_ref[...]
            isref_ref[0] = isref[:valid_rows].astype(isref_ref.dtype)

        # --- every hw tile: output_masks = einsum('ltbnc,tbchw->ltbnhw') ---------------
        m = jnp.dot(kern_sc[...].astype(cd), f_ref[0].astype(cd),
                    preferred_element_type=jnp.float32)
        masks_ref[0] = m[:valid_rows].astype(masks_ref.dtype)

    return kernel


def fused_heads_and_masks(hs_r, f_r, params, compute_dtype=jnp.float32,
                          masks_dtype=jnp.float32, lane_cap=None):
    """hs_r: (T*B, LN, d), f_r: (T*B, C, H*W) ->
       masks: (T*B, LN, H*W) masks_dtype,  is_referred: (T*B, LN, 2) f32."""
    TB, LN, d = hs_r.shape
    TB2, C, HW = f_r.shape
    assert TB == TB2

    cap = lane_cap if lane_cap is not None else _lane_tile_cap()
    hw_tile, HW_pad = _pick_lane_tile(HW, cap)
    n_hw = HW_pad // hw_tile
    if HW_pad != HW:
        f_r = jnp.pad(f_r, ((0, 0), (0, 0), (0, HW_pad - HW)))

    # Pad the LN row dim (input side only) to a multiple of 8 for clean MXU / sublane
    # layout; outputs stay LN-rowed so there is no extra HBM slice pass on the masks.
    LN_pad = _round_up(LN, 8)
    if LN_pad != LN:
        hs_r = jnp.pad(hs_r, ((0, 0), (0, LN_pad - LN), (0, 0)))

    cd = jnp.dtype(compute_dtype)
    w0 = params["mlp_w0"].astype(cd)
    w1 = params["mlp_w1"].astype(cd)
    wr = params["ref_w"].astype(cd)
    b0 = params["mlp_b0"].reshape(1, -1).astype(jnp.float32)
    b1 = params["mlp_b1"].reshape(1, -1).astype(jnp.float32)
    br = params["ref_b"].reshape(1, -1).astype(jnp.float32)
    mask_dim = w1.shape[1]

    isz = lambda dt: jnp.dtype(dt).itemsize
    block_bytes = (
        2 * LN_pad * d * isz(hs_r.dtype)                 # hs block (double buffered)
        + 2 * C * hw_tile * isz(f_r.dtype)               # frame-feature lane tile
        + 2 * LN * hw_tile * isz(masks_dtype)            # masks output lane tile
        + 2 * LN * 2 * 4                                 # is_referred output
        + (d * d + d * mask_dim + d * 2) * isz(cd)       # weights
        + (d + mask_dim + 2) * 4                         # biases
        + LN_pad * mask_dim * 4                          # kern scratch
    )

    masks, isref = pl.pallas_call(
        _make_heads_masks_kernel(LN, cd),
        out_shape=(
            jax.ShapeDtypeStruct((TB, LN, HW_pad), masks_dtype),
            jax.ShapeDtypeStruct((TB, LN, 2), jnp.float32),
        ),
        grid_spec=pltpu.PrefetchScalarGridSpec(
            num_scalar_prefetch=0,
            grid=(TB, n_hw),
            in_specs=[
                pl.BlockSpec((1, LN_pad, d), lambda tb, hw: (tb, 0, 0)),       # hs (hw-resident)
                pl.BlockSpec((1, C, hw_tile), lambda tb, hw: (tb, 0, hw)),     # frame features
                pl.BlockSpec((d, d), lambda tb, hw: (0, 0)),                   # W0
                pl.BlockSpec((1, d), lambda tb, hw: (0, 0)),                   # b0
                pl.BlockSpec((d, mask_dim), lambda tb, hw: (0, 0)),            # W1
                pl.BlockSpec((1, mask_dim), lambda tb, hw: (0, 0)),            # b1
                pl.BlockSpec((d, 2), lambda tb, hw: (0, 0)),                   # Wr
                pl.BlockSpec((1, 2), lambda tb, hw: (0, 0)),                   # br
            ],
            out_specs=(
                pl.BlockSpec((1, LN, hw_tile), lambda tb, hw: (tb, 0, hw)),    # masks (lane-dense)
                pl.BlockSpec((1, LN, 2), lambda tb, hw: (tb, 0, 0)),           # is_referred
            ),
            scratch_shapes=[pltpu.VMEM((LN_pad, mask_dim), jnp.float32)],      # instance kernels
        ),
        compiler_params=pltpu.CompilerParams(
            dimension_semantics=("parallel", "arbitrary"),
            vmem_limit_bytes=_vmem_limit(block_bytes)),
    )(hs_r, f_r, w0, b0, w1, b1, wr, br)

    if HW_pad != HW:
        masks = masks[..., :HW]
    return masks, isref


# ----------------------------------------------------------------------------
# 1x1 Conv2d vid-embed projection, NCHW in / NCHW out (no XLA transposes)
#   per grid step:  tb_blk frames;  (d, Cin) @ (Cin, hw_tile) + b  -> (d, hw_tile)
# ----------------------------------------------------------------------------
def _make_vid_proj_kernel(tb_blk, compute_dtype):
    cd = compute_dtype

    def kernel(x_ref, wt_ref, b_ref, o_ref):
        wt = wt_ref[...]
        b = b_ref[...]       # (d, 1) f32; hw-invariant & tiny (lane-width-1 load is negligible)
        for t in range(tb_blk):                      # static, small: amortizes grid-step cost
            y = jnp.dot(wt, x_ref[t].astype(cd),
                        preferred_element_type=jnp.float32) + b
            o_ref[t] = y.astype(o_ref.dtype)

    return kernel


def vid_embed_proj(x_flat, w, b, compute_dtype=jnp.float32, lane_cap=None):
    """x_flat: (T*B, Cin, H*W), w: (Cin, d), b: (d,) -> (T*B, d, H*W) f32."""
    TB, Cin, HW = x_flat.shape
    d = w.shape[1]

    # Lower cap here: with large backbone Cin the f32 input block must stay well under the
    # v7x scoped-VMEM default while remaining double-buffered.
    cap = lane_cap if lane_cap is not None else min(_lane_tile_cap(), 1024)
    hw_tile, HW_pad = _pick_lane_tile(HW, cap)
    n_hw = HW_pad // hw_tile
    if HW_pad != HW:
        x_flat = jnp.pad(x_flat, ((0, 0), (0, 0), (0, HW_pad - HW)))

    tb_blk = 1
    for cand in (8, 4, 2, 1):                        # frames per grid step
        if TB % cand == 0:
            tb_blk = cand
            break

    cd = jnp.dtype(compute_dtype)
    wt = jnp.transpose(w).astype(cd)                 # (d, Cin) — tiny weight transpose
    b2 = b.reshape(d, 1).astype(jnp.float32)

    isz = lambda dt: jnp.dtype(dt).itemsize
    block_bytes = (2 * tb_blk * Cin * hw_tile * isz(x_flat.dtype)
                   + 2 * tb_blk * d * hw_tile * 4
                   + d * Cin * isz(cd) + d * 4)

    out = pl.pallas_call(
        _make_vid_proj_kernel(tb_blk, cd),
        out_shape=jax.ShapeDtypeStruct((TB, d, HW_pad), jnp.float32),
        grid_spec=pltpu.PrefetchScalarGridSpec(
            num_scalar_prefetch=0,
            grid=(TB // tb_blk, n_hw),
            in_specs=[
                pl.BlockSpec((tb_blk, Cin, hw_tile), lambda i, hw: (i, 0, hw)),
                pl.BlockSpec((d, Cin), lambda i, hw: (0, 0)),
                pl.BlockSpec((d, 1), lambda i, hw: (0, 0)),
            ],
            out_specs=pl.BlockSpec((tb_blk, d, hw_tile), lambda i, hw: (i, 0, hw)),
        ),
        compiler_params=pltpu.CompilerParams(
            dimension_semantics=("parallel", "parallel"),
            vmem_limit_bytes=_vmem_limit(block_bytes)),
    )(x_flat, wt, b2)

    if HW_pad != HW:
        out = out[..., :HW]
    return out


# ----------------------------------------------------------------------------
# MTTR forward (module-owned compute)
# ----------------------------------------------------------------------------
def mttr_forward(params, hs, decoded_frame_features, backbone_final_features,
                 aux_loss=False, compute_dtype=jnp.float32, masks_dtype=jnp.float32,
                 lane_cap=None):
    """
    hs:                       (L, T, B, num_queries, d_model)   transformer decoder states
    decoded_frame_features:   (T, B, mask_dim, H_mask, W_mask)  spatial-decoder output
    backbone_final_features:  (T, B, C_backbone, H_f, W_f)      backbone final layer (NCHW)
    """
    T, B, Cb, Hf, Wf = backbone_final_features.shape
    d_model = params["vid_proj_w"].shape[1]

    # vid_embed_proj (1x1 conv) — NCHW end-to-end; feeds the (stubbed) transformer.
    x = backbone_final_features.reshape(T * B, Cb, Hf * Wf)
    vid_embeds = vid_embed_proj(x, params["vid_proj_w"], params["vid_proj_b"],
                                compute_dtype, lane_cap)
    vid_embeds = vid_embeds.reshape(T, B, d_model, Hf, Wf)

    L, T2, B2, N, d = hs.shape
    Tm, Bm, C, Hm, Wm = decoded_frame_features.shape

    # Only compute the decoder layers that are consumed: the module returns
    # layer_outputs[-1] plus (only if aux_loss) aux_outputs for earlier layers.
    hs_used = hs if aux_loss else hs[-1:]
    Lu = hs_used.shape[0]

    # (Lu,T,B,N,d) -> (T*B, Lu*N, d): layers folded into matmul rows so each frame's
    # feature tile is DMA'd exactly once for all layers/queries.
    hs_r = jnp.transpose(hs_used, (1, 2, 0, 3, 4)).reshape(T2 * B2, Lu * N, d)
    f_r = decoded_frame_features.reshape(Tm * Bm, C, Hm * Wm)

    masks_r, isref_r = fused_heads_and_masks(hs_r, f_r, params, compute_dtype,
                                             masks_dtype, lane_cap)

    masks = masks_r.reshape(T2, B2, Lu, N, Hm, Wm)
    is_referred = isref_r.reshape(T2, B2, Lu, N, 2)

    out = {
        "pred_masks": masks[:, :, -1],                  # (T, B, N, H_mask, W_mask)
        "pred_is_referred": is_referred[:, :, -1],      # (T, B, N, 2)
    }
    if aux_loss:
        out["aux_outputs"] = [
            {"pred_masks": masks[:, :, l], "pred_is_referred": is_referred[:, :, l]}
            for l in range(Lu - 1)
        ]
    return out, vid_embeds


# ----------------------------------------------------------------------------
# main
# ----------------------------------------------------------------------------
if __name__ == "__main__":
    T, B = 2, 2
    L = 3                    # decoder layers
    N = 10                   # num_queries (not a multiple of 8 -> exercises row padding)
    d_model = 32
    mask_dim = 8
    Cb, Hf, Wf = 4, 8, 8     # backbone final-layer feature map
    Hm, Wm = 18, 18          # mask resolution (H*W = 324, not 128-aligned)

    key = jax.random.PRNGKey(0)
    ks = jax.random.split(key, 11)

    params = {
        "vid_proj_w": 0.1 * jax.random.normal(ks[0], (Cb, d_model), jnp.float32),
        "vid_proj_b": 0.1 * jax.random.normal(ks[1], (d_model,), jnp.float32),
        "mlp_w0": 0.1 * jax.random.normal(ks[2], (d_model, d_model), jnp.float32),
        "mlp_b0": 0.1 * jax.random.normal(ks[3], (d_model,), jnp.float32),
        "mlp_w1": 0.1 * jax.random.normal(ks[4], (d_model, mask_dim), jnp.float32),
        "mlp_b1": 0.1 * jax.random.normal(ks[5], (mask_dim,), jnp.float32),
        "ref_w": 0.1 * jax.random.normal(ks[6], (d_model, 2), jnp.float32),
        "ref_b": 0.1 * jax.random.normal(ks[7], (2,), jnp.float32),
    }

    hs = jax.random.normal(ks[8], (L, T, B, N, d_model), jnp.float32)
    decoded_frame_features = jax.random.normal(ks[9], (T, B, mask_dim, Hm, Wm), jnp.float32)
    backbone_final_features = jax.random.normal(ks[10], (T, B, Cb, Hf, Wf), jnp.float32)

    # pure-JAX reference
    hs2 = hs.reshape(-1, d_model)
    ref_kern = (jnp.maximum(hs2 @ params["mlp_w0"] + params["mlp_b0"], 0.0)
                @ params["mlp_w1"] + params["mlp_b1"]).reshape(L, T, B, N, mask_dim)
    ref_isref = (hs2 @ params["ref_w"] + params["ref_b"]).reshape(L, T, B, N, 2)
    ref_masks = jnp.einsum("ltbnc,tbchw->ltbnhw", ref_kern, decoded_frame_features)
    ref_vid = (jnp.einsum("tbchw,cd->tbdhw", backbone_final_features, params["vid_proj_w"])
               + params["vid_proj_b"][None, None, :, None, None])

    tol = dict(atol=5e-3, rtol=5e-3)

    # --- 1) f32, last-layer-only (module default), no lane tiling ---------------------
    out, vid = mttr_forward(params, hs, decoded_frame_features, backbone_final_features)
    jax.block_until_ready(out)
    jax.block_until_ready(vid)
    assert out["pred_masks"].shape == (T, B, N, Hm, Wm)
    assert out["pred_is_referred"].shape == (T, B, N, 2)
    assert vid.shape == (T, B, d_model, Hf, Wf)
    assert jnp.allclose(out["pred_masks"], ref_masks[-1], **tol)
    assert jnp.allclose(out["pred_is_referred"], ref_isref[-1], **tol)
    assert jnp.allclose(vid, ref_vid, **tol)

    # --- 2) f32, forced lane tiling + H*W padding (exercises the kern-scratch hoist) ---
    out2, _ = mttr_forward(params, hs, decoded_frame_features, backbone_final_features,
                           lane_cap=128)
    jax.block_until_ready(out2)
    assert jnp.allclose(out2["pred_masks"], ref_masks[-1], **tol)
    assert jnp.allclose(out2["pred_is_referred"], ref_isref[-1], **tol)

    # --- 3) aux_loss=True: all decoder layers (matches the PyTorch aux path) -----------
    out3, _ = mttr_forward(params, hs, decoded_frame_features, backbone_final_features,
                           aux_loss=True)
    jax.block_until_ready(out3)
    assert jnp.allclose(out3["pred_masks"], ref_masks[-1], **tol)
    assert len(out3["aux_outputs"]) == L - 1
    for l in range(L - 1):
        assert jnp.allclose(out3["aux_outputs"][l]["pred_masks"], ref_masks[l], **tol)
        assert jnp.allclose(out3["aux_outputs"][l]["pred_is_referred"], ref_isref[l], **tol)

    # --- 4) bf16 MXU operands + bf16 masks output (v6e/v7x fast path) ------------------
    out4, vid4 = mttr_forward(params, hs, decoded_frame_features, backbone_final_features,
                              compute_dtype=jnp.bfloat16, masks_dtype=jnp.bfloat16,
                              lane_cap=128)
    jax.block_until_ready(out4)
    jax.block_until_ready(vid4)
    assert out4["pred_masks"].dtype == jnp.bfloat16
    assert jnp.allclose(out4["pred_masks"].astype(jnp.float32), ref_masks[-1],
                        atol=2e-1, rtol=2e-1)
    assert jnp.allclose(out4["pred_is_referred"], ref_isref[-1], atol=2e-1, rtol=2e-1)
    assert jnp.allclose(vid4, ref_vid, atol=2e-1, rtol=2e-1)

    print("KERNEL_OK")
</pallas_src>

<mosaic_0001>
module attributes {stable_mosaic.version = 11 : i64} {
  func.func @kernel(%arg0: i32, %arg1: i32, %arg2: memref<4x4x64xf32, #tpu.memory_space<vmem>>, %arg3: memref<32x4xf32, #tpu.memory_space<vmem>>, %arg4: memref<32x1xf32, #tpu.memory_space<vmem>>, %arg5: memref<4x32x64xf32, #tpu.memory_space<vmem>>) attributes {dimension_semantics = [#tpu.dimension_semantics<parallel>, #tpu.dimension_semantics<parallel>], iteration_bounds = array<i64: 1, 1>, scalar_prefetch = 0 : i64, scratch_operands = 0 : i64, tpu.core_type = #tpu.core_type<tc>, window_params = [{transform_indices = @transform_0, window_bounds = array<i64: 4, 4, 64>}, {pipeline_mode = #tpu.pipeline_mode<synchronous>, transform_indices = @transform_1, window_bounds = array<i64: 32, 4>}, {pipeline_mode = #tpu.pipeline_mode<synchronous>, transform_indices = @transform_2, window_bounds = array<i64: 32, 1>}, {transform_indices = @transform_3, window_bounds = array<i64: 4, 32, 64>}]} {
    %c0 = arith.constant 0 : index
    %c0_0 = arith.constant 0 : index
    %0 = vector.load %arg3[%c0, %c0_0] : memref<32x4xf32, #tpu.memory_space<vmem>>, vector<32x4xf32>
    %c0_1 = arith.constant 0 : index
    %c0_2 = arith.constant 0 : index
    %1 = vector.load %arg4[%c0_1, %c0_2] : memref<32x1xf32, #tpu.memory_space<vmem>>, vector<32x1xf32>
    %c0_3 = arith.constant 0 : index
    %c0_4 = arith.constant 0 : index
    %c0_5 = arith.constant 0 : index
    %2 = vector.load %arg2[%c0_3, %c0_4, %c0_5] : memref<4x4x64xf32, #tpu.memory_space<vmem>>, vector<1x4x64xf32>
    %3 = vector.shape_cast %2 : vector<1x4x64xf32> to vector<4x64xf32>
    %cst = arith.constant dense<0.000000e+00> : vector<32x64xf32>
    %4 = tpu.matmul %0, %3, %cst {dimension_numbers = #tpu.dot_dimension_numbers<[1], [0], [0], [1], [0, 0, 1, 1], [], []>} : vector<32x4xf32>, vector<4x64xf32>, vector<32x64xf32> -> vector<32x64xf32>
    %5 = vector.broadcast %1 : vector<32x1xf32> to vector<32x64xf32>
    %6 = arith.addf %4, %5 : vector<32x64xf32>
    %c0_6 = arith.constant 0 : index
    %c0_7 = arith.constant 0 : index
    %c0_8 = arith.constant 0 : index
    %7 = vector.load %arg5[%c0_6, %c0_7, %c0_8] : memref<4x32x64xf32, #tpu.memory_space<vmem>>, vector<1x32x64xf32>
    %8 = vector.shape_cast %7 : vector<1x32x64xf32> to vector<32x64xf32>
    %9 = vector.shape_cast %6 : vector<32x64xf32> to vector<1x32x64xf32>
    tpu.vector_store %arg5[%c0_6, %c0_7, %c0_8], %9 {strides = array<i32>} : memref<4x32x64xf32, #tpu.memory_space<vmem>>, vector<1x32x64xf32>,
    %c1 = arith.constant 1 : index
    %c0_9 = arith.constant 0 : index
    %c0_10 = arith.constant 0 : index
    %10 = vector.load %arg2[%c1, %c0_9, %c0_10] : memref<4x4x64xf32, #tpu.memory_space<vmem>>, vector<1x4x64xf32>
    %11 = vector.shape_cast %10 : vector<1x4x64xf32> to vector<4x64xf32>
    %cst_11 = arith.constant dense<0.000000e+00> : vector<32x64xf32>
    %12 = tpu.matmul %0, %11, %cst_11 {dimension_numbers = #tpu.dot_dimension_numbers<[1], [0], [0], [1], [0, 0, 1, 1], [], []>} : vector<32x4xf32>, vector<4x64xf32>, vector<32x64xf32> -> vector<32x64xf32>
    %13 = vector.broadcast %1 : vector<32x1xf32> to vector<32x64xf32>
    %14 = arith.addf %12, %13 : vector<32x64xf32>
    %c1_12 = arith.constant 1 : index
    %c0_13 = arith.constant 0 : index
    %c0_14 = arith.constant 0 : index
    %15 = vector.load %arg5[%c1_12, %c0_13, %c0_14] : memref<4x32x64xf32, #tpu.memory_space<vmem>>, vector<1x32x64xf32>
    %16 = vector.shape_cast %15 : vector<1x32x64xf32> to vector<32x64xf32>
    %17 = vector.shape_cast %14 : vector<32x64xf32> to vector<1x32x64xf32>
    tpu.vector_store %arg5[%c1_12, %c0_13, %c0_14], %17 {strides = array<i32>} : memref<4x32x64xf32, #tpu.memory_space<vmem>>, vector<1x32x64xf32>,
    %c2 = arith.constant 2 : index
    %c0_15 = arith.constant 0 : index
    %c0_16 = arith.constant 0 : index
    %18 = vector.load %arg2[%c2, %c0_15, %c0_16] : memref<4x4x64xf32, #tpu.memory_space<vmem>>, vector<1x4x64xf32>
    %19 = vector.shape_cast %18 : vector<1x4x64xf32> to vector<4x64xf32>
    %cst_17 = arith.constant dense<0.000000e+00> : vector<32x64xf32>
    %20 = tpu.matmul %0, %19, %cst_17 {dimension_numbers = #tpu.dot_dimension_numbers<[1], [0], [0], [1], [0, 0, 1, 1], [], []>} : vector<32x4xf32>, vector<4x64xf32>, vector<32x64xf32> -> vector<32x64xf32>
    %21 = vector.broadcast %1 : vector<32x1xf32> to vector<32x64xf32>
    %22 = arith.addf %20, %21 : vector<32x64xf32>
    %c2_18 = arith.constant 2 : index
    %c0_19 = arith.constant 0 : index
    %c0_20 = arith.constant 0 : index
    %23 = vector.load %arg5[%c2_18, %c0_19, %c0_20] : memref<4x32x64xf32, #tpu.memory_space<vmem>>, vector<1x32x64xf32>
    %24 = vector.shape_cast %23 : vector<1x32x64xf32> to vector<32x64xf32>
    %25 = vector.shape_cast %22 : vector<32x64xf32> to vector<1x32x64xf32>
    tpu.vector_store %arg5[%c2_18, %c0_19, %c0_20], %25 {strides = array<i32>} : memref<4x32x64xf32, #tpu.memory_space<vmem>>, vector<1x32x64xf32>,
    %c3 = arith.constant 3 : index
    %c0_21 = arith.constant 0 : index
    %c0_22 = arith.constant 0 : index
    %26 = vector.load %arg2[%c3, %c0_21, %c0_22] : memref<4x4x64xf32, #tpu.memory_space<vmem>>, vector<1x4x64xf32>
    %27 = vector.shape_cast %26 : vector<1x4x64xf32> to vector<4x64xf32>
    %cst_23 = arith.constant dense<0.000000e+00> : vector<32x64xf32>
    %28 = tpu.matmul %0, %27, %cst_23 {dimension_numbers = #tpu.dot_dimension_numbers<[1], [0], [0], [1], [0, 0, 1, 1], [], []>} : vector<32x4xf32>, vector<4x64xf32>, vector<32x64xf32> -> vector<32x64xf32>
    %29 = vector.broadcast %1 : vector<32x1xf32> to vector<32x64xf32>
    %30 = arith.addf %28, %29 : vector<32x64xf32>
    %c3_24 = arith.constant 3 : index
    %c0_25 = arith.constant 0 : index
    %c0_26 = arith.constant 0 : index
    %31 = vector.load %arg5[%c3_24, %c0_25, %c0_26] : memref<4x32x64xf32, #tpu.memory_space<vmem>>, vector<1x32x64xf32>
    %32 = vector.shape_cast %31 : vector<1x32x64xf32> to vector<32x64xf32>
    %33 = vector.shape_cast %30 : vector<32x64xf32> to vector<1x32x64xf32>
    tpu.vector_store %arg5[%c3_24, %c0_25, %c0_26], %33 {strides = array<i32>} : memref<4x32x64xf32, #tpu.memory_space<vmem>>, vector<1x32x64xf32>,
    return
  }
  func.func @transform_0(%arg0: i32, %arg1: i32) -> (i32, i32, i32) {
    %c0_i32 = arith.constant 0 : i32
    %c0_i32_0 = arith.constant 0 : i32
    return %arg0, %c0_i32, %arg1 : i32, i32, i32
  }
  func.func @transform_1(%arg0: i32, %arg1: i32) -> (i32, i32) {
    %c0_i32 = arith.constant 0 : i32
    %c0_i32_0 = arith.constant 0 : i32
    %c0_i32_1 = arith.constant 0 : i32
    return %c0_i32, %c0_i32_0 : i32, i32
  }
  func.func @transform_2(%arg0: i32, %arg1: i32) -> (i32, i32) {
    %c0_i32 = arith.constant 0 : i32
    %c0_i32_0 = arith.constant 0 : i32
    %c0_i32_1 = arith.constant 0 : i32
    return %c0_i32, %c0_i32_0 : i32, i32
  }
  func.func @transform_3(%arg0: i32, %arg1: i32) -> (i32, i32, i32) {
    %c0_i32 = arith.constant 0 : i32
    %c0_i32_0 = arith.constant 0 : i32
    return %arg0, %c0_i32, %arg1 : i32, i32, i32
  }
}

</mosaic_0001>

<llo_original>
// kernel: tpu_custom_call.1
$region0: #{tpu_custom_call.1}
  #allocation0 [shape = 'u32[]', space=smem, size = 0x4, offset = 0x4, fixed_abs, tag = 'smem constant byte address 0x4 - core index']
  #allocation1 [shape = 'u32[144,128]{1,0:T(1,128)}', space=vmem, size = 0x12000, scoped, tag = 'internal scratch']
  %s0 = inlined_call_operand.vmem [shape: f32[4,4,64], index: 0, kind: input, shape index: {}]
  %s1 = inlined_call_operand.vmem [shape: f32[32,4], index: 1, kind: input, shape index: {}]
  %s2 = inlined_call_operand.vmem [shape: f32[32,1], index: 2, kind: input, shape index: {}]
  %s3 = inlined_call_operand.hbm [shape: f32[4,32,64], index: 3, kind: output, shape index: {}]
  %s4 = sld [smem:[#allocation0]]
  $region22: #{tpu_custom_call.1} parent=0
    _
  %s6 = ssub.s32 1, %s4
  %s7 = scalar_select 0, %s6, %s4
  $region1: #{tpu_custom_call.1} parent=0
    #allocation2 [shape = 'u8[65536]{0}', space=vmem, size = 0x10000, scoped, tag = 'output window, operand 0, single buffered']
    #allocation3 [shape = 's32[1]{0}', space=sflag, size = 0x4, scoped, tag = 'scoped memory for tpu_custom_call.1']
    %8 = vsyncpa [#allocation3], 0
    // Predicated region
    $region2: #{tpu_custom_call.1} parent=1 // pred_check
      _
    $region3: #{tpu_custom_call.1} parent=1 // pred_check_branch
      %10 = sbr.rel (0) target = $region5
    $region4: #{tpu_custom_call.1} parent=1 // pred_region
      _
    $region5: #{tpu_custom_call.1} parent=1 // pred_fallthru
      _
    // Predicated region
    $region6: #{tpu_custom_call.1} parent=1 // pred_check
      _
    $region7: #{tpu_custom_call.1} parent=1 // pred_check_branch
      %12 = sbr.rel (0) target = $region9
    $region8: #{tpu_custom_call.1} parent=1 // pred_region
      _
    $region9: #{tpu_custom_call.1} parent=1 // pred_fallthru
      _
    // Predicated region
    $region10: #{tpu_custom_call.1} parent=1 // pred_check
      _
    $region11: #{tpu_custom_call.1} parent=1 // pred_check_branch
      %14 = sbr.rel (0) target = $region13
    $region12: #{tpu_custom_call.1} parent=1 // pred_region
      _
    $region13: #{tpu_custom_call.1} parent=1 // pred_fallthru
      _
    %v15 = vld [vmem:[%s1] sm:$0xff]
    %v16 = vld [vmem:[%s1 + $0x8] sm:$0xff]
    %v17 = vld [vmem:[%s1 + $0x10] sm:$0xff]
    %v18 = vld [vmem:[%s1 + $0x18] sm:$0xff]
    %v19 = vld [vmem:[%s2] sm:$0xff]
    %v20 = vld [vmem:[%s2 + $0x8] sm:$0xff]
    %v21 = vld [vmem:[%s2 + $0x10] sm:$0xff]
    %v22 = vld [vmem:[%s2 + $0x18] sm:$0xff]
    %v23 = vld [vmem:[%s0] sm:$0xf]
    %25 = vset.pattern.permute.xlu0 0
    %26 = vperm.xlu0 %25, %v19
    %v27 = vpop.permute.xlu0 %26
    %30 = vset.pattern.permute.xlu0 0
    %31 = vperm.xlu0 %30, %v20
    %v32 = vpop.permute.xlu0 %31
    %35 = vset.pattern.permute.xlu0 0
    %36 = vperm.xlu0 %35, %v21
    %v37 = vpop.permute.xlu0 %36
    %40 = vset.pattern.permute.xlu0 0
    %41 = vperm.xlu0 %40, %v22
    %v42 = vpop.permute.xlu0 %41
    %vm44 = vcmask 31744
    %v46 = vsel %vm44, %v15, 0
    %v49 = vsel %vm44, %v16, 0
    %v52 = vsel %vm44, %v17, 0
    %v55 = vsel %vm44, %v18, 0
    %vm57 = vcmask 1043456
    %v59 = vsel %vm57, %v23, 0
    %61 = vmatprep.subr.mxu0 0.0
    %62 = vmatpush1.msra.mxu0 %v59
    %63 = vmatprep.subr.mxu0 0.0
    %64 = vmatpush1.msra.mxu0 0.0
    %65 = vmatprep.subr.mxu0 0.0
    %66 = vmatpush1.msra.mxu0 0.0
    %67 = vmatprep.subr.mxu0 0.0
    %68 = vmatpush1.msra.mxu0 0.0
    %69 = vmatprep.subr.mxu0 0.0
    %70 = vmatpush1.msra.mxu0 0.0
    %71 = vmatprep.subr.mxu0 0.0
    %72 = vmatpush1.msra.mxu0 0.0
    %73 = vmatprep.subr.mxu0 0.0
    %74 = vmatpush1.msra.mxu0 0.0
    %75 = vmatprep.subr.mxu0 0.0
    %76 = vmatpush1.msra.mxu0 0.0
    %77 = vmatprep.subr.mxu0 0.0
    %78 = vmatpush1.msra.mxu0 0.0
    %79 = vmatprep.subr.mxu0 0.0
    %80 = vmatpush1.msra.mxu0 0.0
    %81 = vmatprep.subr.mxu0 0.0
    %82 = vmatpush1.msra.mxu0 0.0
    %83 = vmatprep.subr.mxu0 0.0
    %84 = vmatpush1.msra.mxu0 0.0
    %85 = vmatprep.subr.mxu0 0.0
    %86 = vmatpush1.msra.mxu0 0.0
    %87 = vmatprep.subr.mxu0 0.0
    %88 = vmatpush1.msra.mxu0 0.0
    %89 = vmatprep.subr.mxu0 0.0
    %90 = vmatpush1.msra.mxu0 0.0
    %91 = vmatprep.subr.mxu0 0.0
    %92 = vmatpush1.msra.mxu0 0.0
    %93 = vmatprep.subr.mxu0 0.0
    %94 = vmatpush1.msra.mxu0 0.0
    %95 = vmatprep.subr.mxu0 0.0
    %96 = vmatpush1.msra.mxu0 0.0
    %97 = vmatprep.subr.mxu0 0.0
    %98 = vmatpush1.msra.mxu0 0.0
    %99 = vmatprep.subr.mxu0 0.0
    %100 = vmatpush1.msra.mxu0 0.0
    %101 = vmatprep.subr.mxu0 0.0
    %102 = vmatpush1.msra.mxu0 0.0
    %103 = vmatprep.subr.mxu0 0.0
    %104 = vmatpush1.msra.mxu0 0.0
    %105 = vmatprep.subr.mxu0 0.0
    %106 = vmatpush1.msra.mxu0 0.0
    %107 = vmatprep.subr.mxu0 0.0
    %108 = vmatpush1.msra.mxu0 0.0
    %109 = vmatprep.subr.mxu0 0.0
    %110 = vmatpush1.msra.mxu0 0.0
    %111 = vmatprep.subr.mxu0 0.0
    %112 = vmatpush1.msra.mxu0 0.0
    %113 = vmatprep.subr.mxu0 0.0
    %114 = vmatpush1.msra.mxu0 0.0
    %115 = vmatprep.subr.mxu0 0.0
    %116 = vmatpush1.msra.mxu0 0.0
    %117 = vmatprep.subr.mxu0 0.0
    %118 = vmatpush1.msra.mxu0 0.0
    %119 = vmatprep.subr.mxu0 0.0
    %120 = vmatpush1.msra.mxu0 0.0
    %121 = vmatprep.subr.mxu0 0.0
    %122 = vmatpush1.msra.mxu0 0.0
    %123 = vmatprep.subr.mxu0 0.0
    %124 = vmatpush1.msra.mxu0 0.0
    %125 = vmatprep.mubr.f32.mxu0 0.0
    %126 = vmatmul.mubr.f32.gmra.mrb[0].mxu0 %v46
    %v127 = vpop.f32.mrb[0].mxu0
    %v128 = vadd.f32 %v27, %v127
    %v129 = vpop.f32.mrb[0].mxu0
    %130 = vmatprep.mubr.f32.mxu0 0.0
    %131 = vmatmul.mubr.f32.gmra.mrb[0].mxu0 %v49
    %v132 = vpop.f32.mrb[0].mxu0
    %v133 = vadd.f32 %v32, %v132
    %v134 = vpop.f32.mrb[0].mxu0
    %135 = vmatprep.mubr.f32.mxu0 0.0
    %136 = vmatmul.mubr.f32.gmra.mrb[0].mxu0 %v52
    %v137 = vpop.f32.mrb[0].mxu0
    %v138 = vadd.f32 %v37, %v137
    %v139 = vpop.f32.mrb[0].mxu0
    %140 = vmatprep.mubr.f32.mxu0 0.0
    %141 = vmatmul.mubr.f32.gmra.mrb[0].mxu0 %v55
    %v142 = vpop.f32.mrb[0].mxu0
    %v143 = vadd.f32 %v42, %v142
    %v144 = vpop.f32.mrb[0].mxu0
    %145 = vdwg.mxu0
    %vm146 = vcmask 523264
    %147 = vst.msk [vmem:[#allocation2] sm:$0xff] %vm146, %v128
    %148 = vst.msk [vmem:[#allocation2 + $0x8] sm:$0xff] %vm146, %v133
    %149 = vst.msk [vmem:[#allocation2 + $0x10] sm:$0xff] %vm146, %v138
    %150 = vst.msk [vmem:[#allocation2 + $0x18] sm:$0xff] %vm146, %v143
    %s151 = scalar_lea.vmem %s0, 4
    %v152 = vld [vmem:[%s151] sm:$0xf]
    %v154 = vsel %vm57, %v152, 0
    %156 = vmatprep.subr.mxu0 0.0
    %157 = vmatpush1.msra.mxu0 %v154
    %158 = vmatprep.subr.mxu0 0.0
    %159 = vmatpush1.msra.mxu0 0.0
    %160 = vmatprep.subr.mxu0 0.0
    %161 = vmatpush1.msra.mxu0 0.0
    %162 = vmatprep.subr.mxu0 0.0
    %163 = vmatpush1.msra.mxu0 0.0
    %164 = vmatprep.subr.mxu0 0.0
    %165 = vmatpush1.msra.mxu0 0.0
    %166 = vmatprep.subr.mxu0 0.0
    %167 = vmatpush1.msra.mxu0 0.0
    %168 = vmatprep.subr.mxu0 0.0
    %169 = vmatpush1.msra.mxu0 0.0
    %170 = vmatprep.subr.mxu0 0.0
    %171 = vmatpush1.msra.mxu0 0.0
    %172 = vmatprep.subr.mxu0 0.0
    %173 = vmatpush1.msra.mxu0 0.0
    %174 = vmatprep.subr.mxu0 0.0
    %175 = vmatpush1.msra.mxu0 0.0
    %176 = vmatprep.subr.mxu0 0.0
    %177 = vmatpush1.msra.mxu0 0.0
    %178 = vmatprep.subr.mxu0 0.0
    %179 = vmatpush1.msra.mxu0 0.0
    %180 = vmatprep.subr.mxu0 0.0
    %181 = vmatpush1.msra.mxu0 0.0
    %182 = vmatprep.subr.mxu0 0.0
    %183 = vmatpush1.msra.mxu0 0.0
    %184 = vmatprep.subr.mxu0 0.0
    %185 = vmatpush1.msra.mxu0 0.0
    %186 = vmatprep.subr.mxu0 0.0
    %187 = vmatpush1.msra.mxu0 0.0
    %188 = vmatprep.subr.mxu0 0.0
    %189 = vmatpush1.msra.mxu0 0.0
    %190 = vmatprep.subr.mxu0 0.0
    %191 = vmatpush1.msra.mxu0 0.0
    %192 = vmatprep.subr.mxu0 0.0
    %193 = vmatpush1.msra.mxu0 0.0
    %194 = vmatprep.subr.mxu0 0.0
    %195 = vmatpush1.msra.mxu0 0.0
    %196 = vmatprep.subr.mxu0 0.0
    %197 = vmatpush1.msra.mxu0 0.0
    %198 = vmatprep.subr.mxu0 0.0
    %199 = vmatpush1.msra.mxu0 0.0
    %200 = vmatprep.subr.mxu0 0.0
    %201 = vmatpush1.msra.mxu0 0.0
    %202 = vmatprep.subr.mxu0 0.0
    %203 = vmatpush1.msra.mxu0 0.0
    %204 = vmatprep.subr.mxu0 0.0
    %205 = vmatpush1.msra.mxu0 0.0
    %206 = vmatprep.subr.mxu0 0.0
    %207 = vmatpush1.msra.mxu0 0.0
    %208 = vmatprep.subr.mxu0 0.0
    %209 = vmatpush1.msra.mxu0 0.0
    %210 = vmatprep.subr.mxu0 0.0
    %211 = vmatpush1.msra.mxu0 0.0
    %212 = vmatprep.subr.mxu0 0.0
    %213 = vmatpush1.msra.mxu0 0.0
    %214 = vmatprep.subr.mxu0 0.0
    %215 = vmatpush1.msra.mxu0 0.0
    %216 = vmatprep.subr.mxu0 0.0
    %217 = vmatpush1.msra.mxu0 0.0
    %218 = vmatprep.subr.mxu0 0.0
    %219 = vmatpush1.msra.mxu0 0.0
    %220 = vmatprep.mubr.f32.mxu0 0.0
    %221 = vmatmul.mubr.f32.gmra.mrb[0].mxu0 %v46
    %v222 = vpop.f32.mrb[0].mxu0
    %v223 = vadd.f32 %v27, %v222
    %v224 = vpop.f32.mrb[0].mxu0
    %225 = vmatprep.mubr.f32.mxu0 0.0
    %226 = vmatmul.mubr.f32.gmra.mrb[0].mxu0 %v49
    %v227 = vpop.f32.mrb[0].mxu0
    %v228 = vadd.f32 %v32, %v227
    %v229 = vpop.f32.mrb[0].mxu0
    %230 = vmatprep.mubr.f32.mxu0 0.0
    %231 = vmatmul.mubr.f32.gmra.mrb[0].mxu0 %v52
    %v232 = vpop.f32.mrb[0].mxu0
    %v233 = vadd.f32 %v37, %v232
    %v234 = vpop.f32.mrb[0].mxu0
    %235 = vmatprep.mubr.f32.mxu0 0.0
    %236 = vmatmul.mubr.f32.gmra.mrb[0].mxu0 %v55
    %v237 = vpop.f32.mrb[0].mxu0
    %v238 = vadd.f32 %v42, %v237
    %v239 = vpop.f32.mrb[0].mxu0
    %240 = vdwg.mxu0
    %s241 = scalar_lea.vmem [#allocation2], 32
    %242 = vst.msk [vmem:[%s241] sm:$0xff] %vm146, %v223
    %243 = vst.msk [vmem:[%s241 + $0x8] sm:$0xff] %vm146, %v228
    %244 = vst.msk [vmem:[%s241 + $0x10] sm:$0xff] %vm146, %v233
    %245 = vst.msk [vmem:[%s241 + $0x18] sm:$0xff] %vm146, %v238
    %s246 = scalar_lea.vmem %s0, 8
    %v247 = vld [vmem:[%s246] sm:$0xf]
    %v249 = vsel %vm57, %v247, 0
    %251 = vmatprep.subr.mxu0 0.0
    %252 = vmatpush1.msra.mxu0 %v249
    %253 = vmatprep.subr.mxu0 0.0
    %254 = vmatpush1.msra.mxu0 0.0
    %255 = vmatprep.subr.mxu0 0.0
    %256 = vmatpush1.msra.mxu0 0.0
    %257 = vmatprep.subr.mxu0 0.0
    %258 = vmatpush1.msra.mxu0 0.0
    %259 = vmatprep.subr.mxu0 0.0
    %260 = vmatpush1.msra.mxu0 0.0
    %261 = vmatprep.subr.mxu0 0.0
    %262 = vmatpush1.msra.mxu0 0.0
    %263 = vmatprep.subr.mxu0 0.0
    %264 = vmatpush1.msra.mxu0 0.0
    %265 = vmatprep.subr.mxu0 0.0
    %266 = vmatpush1.msra.mxu0 0.0
    %267 = vmatprep.subr.mxu0 0.0
    %268 = vmatpush1.msra.mxu0 0.0
    %269 = vmatprep.subr.mxu0 0.0
    %270 = vmatpush1.msra.mxu0 0.0
    %271 = vmatprep.subr.mxu0 0.0
    %272 = vmatpush1.msra.mxu0 0.0
    %273 = vmatprep.subr.mxu0 0.0
    %274 = vmatpush1.msra.mxu0 0.0
    %275 = vmatprep.subr.mxu0 0.0
    %276 = vmatpush1.msra.mxu0 0.0
    %277 = vmatprep.subr.mxu0 0.0
    %278 = vmatpush1.msra.mxu0 0.0
    %279 = vmatprep.subr.mxu0 0.0
    %280 = vmatpush1.msra.mxu0 0.0
    %281 = vmatprep.subr.mxu0 0.0
    %282 = vmatpush1.msra.mxu0 0.0
    %283 = vmatprep.subr.mxu0 0.0
    %284 = vmatpush1.msra.mxu0 0.0
    %285 = vmatprep.subr.mxu0 0.0
    %286 = vmatpush1.msra.mxu0 0.0
    %287 = vmatprep.subr.mxu0 0.0
    %288 = vmatpush1.msra.mxu0 0.0
    %289 = vmatprep.subr.mxu0 0.0
    %290 = vmatpush1.msra.mxu0 0.0
    %291 = vmatprep.subr.mxu0 0.0
    %292 = vmatpush1.msra.mxu0 0.0
    %293 = vmatprep.subr.mxu0 0.0
    %294 = vmatpush1.msra.mxu0 0.0
    %295 = vmatprep.subr.mxu0 0.0
    %296 = vmatpush1.msra.mxu0 0.0
    %297 = vmatprep.subr.mxu0 0.0
    %298 = vmatpush1.msra.mxu0 0.0
    %299 = vmatprep.subr.mxu0 0.0
    %300 = vmatpush1.msra.mxu0 0.0
    %301 = vmatprep.subr.mxu0 0.0
    %302 = vmatpush1.msra.mxu0 0.0
    %303 = vmatprep.subr.mxu0 0.0
    %304 = vmatpush1.msra.mxu0 0.0
    %305 = vmatprep.subr.mxu0 0.0
    %306 = vmatpush1.msra.mxu0 0.0
    %307 = vmatprep.subr.mxu0 0.0
    %308 = vmatpush1.msra.mxu0 0.0
    %309 = vmatprep.subr.mxu0 0.0
    %310 = vmatpush1.msra.mxu0 0.0
    %311 = vmatprep.subr.mxu0 0.0
    %312 = vmatpush1.msra.mxu0 0.0
    %313 = vmatprep.subr.mxu0 0.0
    %314 = vmatpush1.msra.mxu0 0.0
    %315 = vmatprep.mubr.f32.mxu0 0.0
    %316 = vmatmul.mubr.f32.gmra.mrb[0].mxu0 %v46
    %v317 = vpop.f32.mrb[0].mxu0
    %v318 = vadd.f32 %v27, %v317
    %v319 = vpop.f32.mrb[0].mxu0
    %320 = vmatprep.mubr.f32.mxu0 0.0
    %321 = vmatmul.mubr.f32.gmra.mrb[0].mxu0 %v49
    %v322 = vpop.f32.mrb[0].mxu0
    %v323 = vadd.f32 %v32, %v322
    %v324 = vpop.f32.mrb[0].mxu0
    %325 = vmatprep.mubr.f32.mxu0 0.0
    %326 = vmatmul.mubr.f32.gmra.mrb[0].mxu0 %v52
    %v327 = vpop.f32.mrb[0].mxu0
    %v328 = vadd.f32 %v37, %v327
    %v329 = vpop.f32.mrb[0].mxu0
    %330 = vmatprep.mubr.f32.mxu0 0.0
    %331 = vmatmul.mubr.f32.gmra.mrb[0].mxu0 %v55
    %v332 = vpop.f32.mrb[0].mxu0
    %v333 = vadd.f32 %v42, %v332
    %v334 = vpop.f32.mrb[0].mxu0
    %335 = vdwg.mxu0
    %s336 = scalar_lea.vmem [#allocation2], 64
    %337 = vst.msk [vmem:[%s336] sm:$0xff] %vm146, %v318
    %338 = vst.msk [vmem:[%s336 + $0x8] sm:$0xff] %vm146, %v323
    %339 = vst.msk [vmem:[%s336 + $0x10] sm:$0xff] %vm146, %v328
    %340 = vst.msk [vmem:[%s336 + $0x18] sm:$0xff] %vm146, %v333
    %s341 = scalar_lea.vmem %s0, 12
    %v342 = vld [vmem:[%s341] sm:$0xf]
    %v344 = vsel %vm57, %v342, 0
    %346 = vmatprep.subr.mxu0 0.0
    %347 = vmatpush1.msra.mxu0 %v344
    %348 = vmatprep.subr.mxu0 0.0
    %349 = vmatpush1.msra.mxu0 0.0
    %350 = vmatprep.subr.mxu0 0.0
    %351 = vmatpush1.msra.mxu0 0.0
    %352 = vmatprep.subr.mxu0 0.0
    %353 = vmatpush1.msra.mxu0 0.0
    %354 = vmatprep.subr.mxu0 0.0
    %355 = vmatpush1.msra.mxu0 0.0
    %356 = vmatprep.subr.mxu0 0.0
    %357 = vmatpush1.msra.mxu0 0.0
    %358 = vmatprep.subr.mxu0 0.0
    %359 = vmatpush1.msra.mxu0 0.0
    %360 = vmatprep.subr.mxu0 0.0
    %361 = vmatpush1.msra.mxu0 0.0
    %362 = vmatprep.subr.mxu0 0.0
    %363 = vmatpush1.msra.mxu0 0.0
    %364 = vmatprep.subr.mxu0 0.0
    %365 = vmatpush1.msra.mxu0 0.0
    %366 = vmatprep.subr.mxu0 0.0
    %367 = vmatpush1.msra.mxu0 0.0
    %368 = vmatprep.subr.mxu0 0.0
    %369 = vmatpush1.msra.mxu0 0.0
    %370 = vmatprep.subr.mxu0 0.0
    %371 = vmatpush1.msra.mxu0 0.0
    %372 = vmatprep.subr.mxu0 0.0
    %373 = vmatpush1.msra.mxu0 0.0
    %374 = vmatprep.subr.mxu0 0.0
    %375 = vmatpush1.msra.mxu0 0.0
    %376 = vmatprep.subr.mxu0 0.0
    %377 = vmatpush1.msra.mxu0 0.0
    %378 = vmatprep.subr.mxu0 0.0
    %379 = vmatpush1.msra.mxu0 0.0
    %380 = vmatprep.subr.mxu0 0.0
    %381 = vmatpush1.msra.mxu0 0.0
    %382 = vmatprep.subr.mxu0 0.0
    %383 = vmatpush1.msra.mxu0 0.0
    %384 = vmatprep.subr.mxu0 0.0
    %385 = vmatpush1.msra.mxu0 0.0
    %386 = vmatprep.subr.mxu0 0.0
    %387 = vmatpush1.msra.mxu0 0.0
    %388 = vmatprep.subr.mxu0 0.0
    %389 = vmatpush1.msra.mxu0 0.0
    %390 = vmatprep.subr.mxu0 0.0
    %391 = vmatpush1.msra.mxu0 0.0
    %392 = vmatprep.subr.mxu0 0.0
    %393 = vmatpush1.msra.mxu0 0.0
    %394 = vmatprep.subr.mxu0 0.0
    %395 = vmatpush1.msra.mxu0 0.0
    %396 = vmatprep.subr.mxu0 0.0
    %397 = vmatpush1.msra.mxu0 0.0
    %398 = vmatprep.subr.mxu0 0.0
    %399 = vmatpush1.msra.mxu0 0.0
    %400 = vmatprep.subr.mxu0 0.0
    %401 = vmatpush1.msra.mxu0 0.0
    %402 = vmatprep.subr.mxu0 0.0
    %403 = vmatpush1.msra.mxu0 0.0
    %404 = vmatprep.subr.mxu0 0.0
    %405 = vmatpush1.msra.mxu0 0.0
    %406 = vmatprep.subr.mxu0 0.0
    %407 = vmatpush1.msra.mxu0 0.0
    %408 = vmatprep.subr.mxu0 0.0
    %409 = vmatpush1.msra.mxu0 0.0
    %410 = vmatprep.mubr.f32.mxu0 0.0
    %411 = vmatmul.mubr.f32.gmra.mrb[0].mxu0 %v46
    %v412 = vpop.f32.mrb[0].mxu0
    %v413 = vadd.f32 %v27, %v412
    %v414 = vpop.f32.mrb[0].mxu0
    %415 = vmatprep.mubr.f32.mxu0 0.0
    %416 = vmatmul.mubr.f32.gmra.mrb[0].mxu0 %v49
    %v417 = vpop.f32.mrb[0].mxu0
    %v418 = vadd.f32 %v32, %v417
    %v419 = vpop.f32.mrb[0].mxu0
    %420 = vmatprep.mubr.f32.mxu0 0.0
    %421 = vmatmul.mubr.f32.gmra.mrb[0].mxu0 %v52
    %v422 = vpop.f32.mrb[0].mxu0
    %v423 = vadd.f32 %v37, %v422
    %v424 = vpop.f32.mrb[0].mxu0
    %425 = vmatprep.mubr.f32.mxu0 0.0
    %426 = vmatmul.mubr.f32.gmra.mrb[0].mxu0 %v55
    %v427 = vpop.f32.mrb[0].mxu0
    %v428 = vadd.f32 %v42, %v427
    %v429 = vpop.f32.mrb[0].mxu0
    %430 = vdwg.mxu0
    %s431 = scalar_lea.vmem [#allocation2], 96
    %432 = vst.msk [vmem:[%s431] sm:$0xff] %vm146, %v413
    %433 = vst.msk [vmem:[%s431 + $0x8] sm:$0xff] %vm146, %v418
    %434 = vst.msk [vmem:[%s431 + $0x10] sm:$0xff] %vm146, %v423
    %435 = vst.msk [vmem:[%s431 + $0x18] sm:$0xff] %vm146, %v428
    // Predicated region
    $region14: #{tpu_custom_call.1} parent=1 // pred_check
      _
    $region15: #{tpu_custom_call.1} parent=1 // pred_check_branch
      %437 = sbr.rel (0) target = $region17
    $region16: #{tpu_custom_call.1} parent=1 // pred_region
      %s439 = ssub.s32 2048, 2048
      %440 = vsyncadd [#allocation3], %s439
      %s441 = sshll.u32 [#allocation2], 4
      %s442 = int_to_ptr.vmem [resolvable:$true] %s441
      %447 = dma.vmem_to_hbm [thread:$0]  %s442, 2048, %s3, [#allocation3], 128, 128, 8
    $region17: #{tpu_custom_call.1} parent=1 // pred_fallthru
      _
    // Predicated region
    $region18: #{tpu_custom_call.1} parent=1 // pred_check
      _
    $region19: #{tpu_custom_call.1} parent=1 // pred_check_branch
      %449 = sbr.rel (0) target = $region21
    $region20: #{tpu_custom_call.1} parent=1 // pred_region
      %450 = dma.done [#allocation3], 2048
    $region21: #{tpu_custom_call.1} parent=1 // pred_fallthru
      _
    %451 = vsyncpa [#allocation3], 1

</llo_original>
